<compile_context>
chip_gen: v7x
topology: tpu7x:2x2x1
jax: 0.10.0
libtpu: 0.0.40
codegen_flags: <defaults>
</compile_context>

<pallas_src>
import math

import jax
import jax.numpy as jnp
from jax.experimental import pallas as pl
from jax.experimental.pallas import tpu as pltpu

Q1 = 0.1
Q9 = 1.0 - Q1

_LANE_CANDIDATES = (2048, 1024, 512, 256, 128)


def _pinball_kernel(out_ref, tgt_ref, var_ref, l10_ref, l90_ref):
    diff = tgt_ref[...] - out_ref[...]      # target - output (shared subexpression)
    var = var_ref[...]
    q_10 = diff + var                        # target - (output - var)
    q_90 = diff - var                        # target - (output + var)
    l10_ref[...] = jnp.maximum(Q1 * q_10, (Q1 - 1.0) * q_10)
    l90_ref[...] = jnp.maximum(Q9 * q_90, (Q9 - 1.0) * q_90)


def _pinball_jnp(output_o, target_o, var_o):
    # Plain-XLA path for ragged tails / tiny arrays (elementwise, fuses to one pass).
    q_10 = target_o - (output_o - var_o)
    q_90 = target_o - (output_o + var_o)
    l10 = jnp.maximum(Q1 * q_10, (Q1 - 1.0) * q_10)
    l90 = jnp.maximum(Q9 * q_90, (Q9 - 1.0) * q_90)
    return l10, l90


def _vmem_capacity_bytes():
    try:
        info = pltpu.get_tpu_info()
        cap = getattr(info, "vmem_capacity_bytes", None)
        if cap:
            return int(cap)
    except Exception:
        pass
    return 64 << 20  # conservative fallback: v7x per-TensorCore VMEM


def _block_budget():
    """Generation-aware block size + scoped-VMEM limit to request.

    5 live slabs (3 inputs + 2 outputs), each double-buffered by the default
    pipeline => 10 * block_bytes of scoped VMEM.  Keep that under ~75% of the
    limit we request (half the physical VMEM, capped at 64 MiB), and never
    above 4 MiB per block.
    """
    vmem_cap = _vmem_capacity_bytes()
    vmem_limit = int(min(vmem_cap // 2, 64 << 20))   # 64 MiB v5e/v6e, 32 MiB v7x
    block_bytes = (vmem_limit * 3 // 4) // 10
    block_bytes = max(1 << 20, min(block_bytes, 4 << 20))
    return block_bytes, vmem_limit


def _pinball_2d(out2d, tgt2d, var2d, row_tile, vmem_limit):
    rows, lanes = out2d.shape
    grid = (-(-rows // row_tile),)
    spec = pl.BlockSpec((row_tile, lanes), lambda i: (i, 0))
    return pl.pallas_call(
        _pinball_kernel,
        out_shape=(
            jax.ShapeDtypeStruct((rows, lanes), out2d.dtype),
            jax.ShapeDtypeStruct((rows, lanes), out2d.dtype),
        ),
        grid_spec=pltpu.PrefetchScalarGridSpec(
            num_scalar_prefetch=0,
            grid=grid,
            in_specs=[spec, spec, spec],
            out_specs=[spec, spec],
        ),
        compiler_params=pltpu.CompilerParams(
            dimension_semantics=("parallel",),
            vmem_limit_bytes=vmem_limit,
        ),
    )(out2d, tgt2d, var2d)


def pinball_loss(output_o, target_o, var_o):
    assert output_o.shape == target_o.shape == var_o.shape
    assert output_o.dtype == target_o.dtype == var_o.dtype
    orig_shape = output_o.shape
    dtype = output_o.dtype
    total = math.prod(orig_shape) if orig_shape else 1
    itemsize = jnp.dtype(dtype).itemsize
    sub = max(8, 32 // itemsize)        # sublane tile: 8 (f32) / 16 (bf16) / 32 (i8)

    aligned = (total // 128) * 128
    if aligned == 0:
        # Tiny array (< one lane row): not worth a kernel launch.
        return _pinball_jnp(output_o, target_o, var_o)

    # ---- lane (last-dim) choice: widest lane-dense width that divides the
    # aligned element count, preferring one that leaves >= 2*sub rows so the
    # grid can be split into >= 2 steps (both v7x TensorCores stream). ----
    lanes = None
    for cand in _LANE_CANDIDATES:
        if aligned % cand == 0 and aligned // cand >= 2 * sub:
            lanes = cand
            break
    if lanes is None:
        for cand in _LANE_CANDIDATES:
            if aligned % cand == 0:
                lanes = cand
                break
    rows = aligned // lanes

    # ---- row-tile choice: as large as the per-generation VMEM budget allows,
    # multiple of the sublane tile, >= 2 grid steps when possible, splitting
    # the rows near-evenly (avoid a tiny masked tail block). ----
    block_bytes, vmem_limit = _block_budget()
    row_tile = (block_bytes // (lanes * itemsize)) // sub * sub
    row_tile = max(sub, row_tile)
    if row_tile > rows:
        row_tile = rows                       # single full-extent block (legal)
    num_blocks = -(-rows // row_tile)
    if num_blocks < 2 and rows >= 2 * sub:
        num_blocks = 2                        # let v7x's two TCs both stream
    if num_blocks > 1:
        row_tile = -(-rows // num_blocks)     # near-even split ...
        row_tile = -(-row_tile // sub) * sub  # ... aligned to the sublane tile

    # ---- Pallas kernel on the 128-aligned prefix; the <128-element tail in
    # plain XLA.  No jnp.pad / slice-off-padding round-trips over HBM. ----
    flat_o = output_o.reshape(-1)
    flat_t = target_o.reshape(-1)
    flat_v = var_o.reshape(-1)

    l10_2d, l90_2d = _pinball_2d(
        flat_o[:aligned].reshape(rows, lanes),
        flat_t[:aligned].reshape(rows, lanes),
        flat_v[:aligned].reshape(rows, lanes),
        row_tile,
        vmem_limit,
    )

    if aligned == total:
        return l10_2d.reshape(orig_shape), l90_2d.reshape(orig_shape)

    t10, t90 = _pinball_jnp(flat_o[aligned:], flat_t[aligned:], flat_v[aligned:])
    l10 = jnp.concatenate([l10_2d.reshape(-1), t10]).reshape(orig_shape)
    l90 = jnp.concatenate([l90_2d.reshape(-1), t90]).reshape(orig_shape)
    return l10, l90


def _reference(output_o, target_o, var_o):
    q_10 = target_o - (output_o - var_o)
    q_90 = target_o - (output_o + var_o)
    l10 = jnp.maximum(Q1 * q_10, (Q1 - 1.0) * q_10)
    l90 = jnp.maximum(Q9 * q_90, (Q9 - 1.0) * q_90)
    return l10, l90


if __name__ == "__main__":
    key = jax.random.PRNGKey(0)
    keys = jax.random.split(key, 9)

    # NCHW inputs, consistent with a PyTorch conv-style pipeline (2048 elems,
    # multiple of 128 -> pure kernel path, 2 grid steps).
    shape = (2, 4, 16, 16)
    output_o = jax.random.normal(keys[0], shape, dtype=jnp.float32)
    target_o = jax.random.normal(keys[1], shape, dtype=jnp.float32)
    var_o = jnp.abs(jax.random.normal(keys[2], shape, dtype=jnp.float32))

    l10, l90 = pinball_loss(output_o, target_o, var_o)
    jax.block_until_ready((l10, l90))
    r10, r90 = _reference(output_o, target_o, var_o)
    assert l10.shape == shape and l90.shape == shape
    assert jnp.allclose(l10, r10, atol=1e-6), "loss_10 mismatch"
    assert jnp.allclose(l90, r90, atol=1e-6), "loss_90 mismatch"

    # Ragged total (645 elements): kernel on the 640-element prefix + jnp tail.
    shape2 = (3, 5, 43)
    out2 = jax.random.normal(keys[3], shape2, dtype=jnp.float32)
    tgt2 = jax.random.normal(keys[4], shape2, dtype=jnp.float32)
    var2 = jnp.abs(jax.random.normal(keys[5], shape2, dtype=jnp.float32))
    p10, p90 = pinball_loss(out2, tgt2, var2)
    jax.block_until_ready((p10, p90))
    q10, q90 = _reference(out2, tgt2, var2)
    assert p10.shape == shape2 and p90.shape == shape2
    assert jnp.allclose(p10, q10, atol=1e-6), "loss_10 mismatch (ragged path)"
    assert jnp.allclose(p90, q90, atol=1e-6), "loss_90 mismatch (ragged path)"

    # Tiny total (< 128 elements): pure-XLA path.
    shape3 = (3, 5, 7)
    out3 = jax.random.normal(keys[6], shape3, dtype=jnp.float32)
    tgt3 = jax.random.normal(keys[7], shape3, dtype=jnp.float32)
    var3 = jnp.abs(jax.random.normal(keys[8], shape3, dtype=jnp.float32))
    s10, s90 = pinball_loss(out3, tgt3, var3)
    jax.block_until_ready((s10, s90))
    u10, u90 = _reference(out3, tgt3, var3)
    assert jnp.allclose(s10, u10, atol=1e-6), "loss_10 mismatch (tiny path)"
    assert jnp.allclose(s90, u90, atol=1e-6), "loss_90 mismatch (tiny path)"

    print("KERNEL_OK")
</pallas_src>

<mosaic_0001>
module attributes {stable_mosaic.version = 11 : i64} {
  func.func @_pinball_kernel(%arg0: i32, %arg1: memref<8x128xf32, #tpu.memory_space<vmem>>, %arg2: memref<8x128xf32, #tpu.memory_space<vmem>>, %arg3: memref<8x128xf32, #tpu.memory_space<vmem>>, %arg4: memref<8x128xf32, #tpu.memory_space<vmem>>, %arg5: memref<8x128xf32, #tpu.memory_space<vmem>>) attributes {dimension_semantics = [#tpu.dimension_semantics<parallel>], iteration_bounds = array<i64: 2>, scalar_prefetch = 0 : i64, scratch_operands = 0 : i64, tpu.core_type = #tpu.core_type<tc>, window_params = [{transform_indices = @transform_0, window_bounds = array<i64: 8, 128>}, {transform_indices = @transform_1, window_bounds = array<i64: 8, 128>}, {transform_indices = @transform_2, window_bounds = array<i64: 8, 128>}, {transform_indices = @transform_3, window_bounds = array<i64: 8, 128>}, {transform_indices = @transform_4, window_bounds = array<i64: 8, 128>}]} {
    %c0 = arith.constant 0 : index
    %c0_0 = arith.constant 0 : index
    %0 = vector.load %arg2[%c0, %c0_0] : memref<8x128xf32, #tpu.memory_space<vmem>>, vector<8x128xf32>
    %c0_1 = arith.constant 0 : index
    %c0_2 = arith.constant 0 : index
    %1 = vector.load %arg1[%c0_1, %c0_2] : memref<8x128xf32, #tpu.memory_space<vmem>>, vector<8x128xf32>
    %2 = arith.subf %0, %1 : vector<8x128xf32>
    %c0_3 = arith.constant 0 : index
    %c0_4 = arith.constant 0 : index
    %3 = vector.load %arg3[%c0_3, %c0_4] : memref<8x128xf32, #tpu.memory_space<vmem>>, vector<8x128xf32>
    %4 = arith.addf %2, %3 : vector<8x128xf32>
    %5 = arith.subf %2, %3 : vector<8x128xf32>
    %cst = arith.constant 1.000000e-01 : f32
    %6 = vector.broadcast %cst : f32 to vector<8x128xf32>
    %7 = arith.mulf %6, %4 : vector<8x128xf32>
    %cst_5 = arith.constant -0.899999976 : f32
    %8 = vector.broadcast %cst_5 : f32 to vector<8x128xf32>
    %9 = arith.mulf %8, %4 : vector<8x128xf32>
    %10 = arith.maximumf %7, %9 : vector<8x128xf32>
    %c0_6 = arith.constant 0 : index
    %c0_7 = arith.constant 0 : index
    %11 = vector.load %arg4[%c0_6, %c0_7] : memref<8x128xf32, #tpu.memory_space<vmem>>, vector<8x128xf32>
    tpu.vector_store %arg4[%c0_6, %c0_7], %10 {strides = array<i32>} : memref<8x128xf32, #tpu.memory_space<vmem>>, vector<8x128xf32>,
    %cst_8 = arith.constant 0.899999976 : f32
    %12 = vector.broadcast %cst_8 : f32 to vector<8x128xf32>
    %13 = arith.mulf %12, %5 : vector<8x128xf32>
    %cst_9 = arith.constant -1.000000e-01 : f32
    %14 = vector.broadcast %cst_9 : f32 to vector<8x128xf32>
    %15 = arith.mulf %14, %5 : vector<8x128xf32>
    %16 = arith.maximumf %13, %15 : vector<8x128xf32>
    %c0_10 = arith.constant 0 : index
    %c0_11 = arith.constant 0 : index
    %17 = vector.load %arg5[%c0_10, %c0_11] : memref<8x128xf32, #tpu.memory_space<vmem>>, vector<8x128xf32>
    tpu.vector_store %arg5[%c0_10, %c0_11], %16 {strides = array<i32>} : memref<8x128xf32, #tpu.memory_space<vmem>>, vector<8x128xf32>,
    return
  }
  func.func @transform_0(%arg0: i32) -> (i32, i32) {
    %c0_i32 = arith.constant 0 : i32
    %c0_i32_0 = arith.constant 0 : i32
    return %arg0, %c0_i32 : i32, i32
  }
  func.func @transform_1(%arg0: i32) -> (i32, i32) {
    %c0_i32 = arith.constant 0 : i32
    %c0_i32_0 = arith.constant 0 : i32
    return %arg0, %c0_i32 : i32, i32
  }
  func.func @transform_2(%arg0: i32) -> (i32, i32) {
    %c0_i32 = arith.constant 0 : i32
    %c0_i32_0 = arith.constant 0 : i32
    return %arg0, %c0_i32 : i32, i32
  }
  func.func @transform_3(%arg0: i32) -> (i32, i32) {
    %c0_i32 = arith.constant 0 : i32
    %c0_i32_0 = arith.constant 0 : i32
    return %arg0, %c0_i32 : i32, i32
  }
  func.func @transform_4(%arg0: i32) -> (i32, i32) {
    %c0_i32 = arith.constant 0 : i32
    %c0_i32_0 = arith.constant 0 : i32
    return %arg0, %c0_i32 : i32, i32
  }
}

</mosaic_0001>

<llo_original>
// kernel: tpu_custom_call.1
$region0: #{tpu_custom_call.1}
  #allocation0 [shape = 'u32[]', space=smem, size = 0x4, offset = 0x4, fixed_abs, tag = 'smem constant byte address 0x4 - core index']
  #allocation1 [shape = 'u32[144,128]{1,0:T(1,128)}', space=vmem, size = 0x12000, scoped, tag = 'internal scratch']
  %s0 = inlined_call_operand.hbm [shape: f32[16,128], index: 0, kind: input, shape index: {}]
  %s1 = inlined_call_operand.hbm [shape: f32[16,128], index: 1, kind: input, shape index: {}]
  %s2 = inlined_call_operand.hbm [shape: f32[16,128], index: 2, kind: input, shape index: {}]
  %s3 = inlined_call_operand.hbm [shape: f32[16,128], index: 3, kind: output, shape index: {0}]
  %s4 = inlined_call_operand.hbm [shape: f32[16,128], index: 4, kind: output, shape index: {1}]
  %5 = xla_tuple %s3, %s4
  %s6 = sld [smem:[#allocation0]]
  $region65: #{tpu_custom_call.1} parent=0
    _
  %s8 = ssub.s32 1, %s6
  %s9 = scalar_select 0, %s8, %s6
  $region1: #{tpu_custom_call.1} parent=0
    #allocation2 [shape = 'u8[8192]{0}', space=vmem, size = 0x2000, scoped, tag = 'input window, operand 0']
    #allocation3 [shape = 's32[2]{0}', space=sflag, size = 0x8, scoped, tag = 'scoped memory for tpu_custom_call.1']
    #allocation4 [shape = 's32[2]{0}', space=sflag, size = 0x8, scoped, tag = 'scoped memory for tpu_custom_call.1']
    #allocation5 [shape = 'u8[8192]{0}', space=vmem, size = 0x2000, scoped, tag = 'input window, operand 1']
    #allocation6 [shape = 's32[2]{0}', space=sflag, size = 0x8, scoped, tag = 'scoped memory for tpu_custom_call.1']
    #allocation7 [shape = 'u8[8192]{0}', space=vmem, size = 0x2000, scoped, tag = 'input window, operand 2']
    #allocation8 [shape = 'u8[8192]{0}', space=vmem, size = 0x2000, scoped, tag = 'output window, operand 0']
    #allocation9 [shape = 'u8[8192]{0}', space=vmem, size = 0x2000, scoped, tag = 'output window, operand 1']
    #allocation10 [shape = 's32[2]{0}', space=sflag, size = 0x8, scoped, tag = 'scoped memory for tpu_custom_call.1']
    %10 = vsyncpa [#allocation3], 0
    %s11 = scalar_lea.sflag [#allocation3], 1
    %12 = vsyncpa %s11, 0
    %13 = vsyncpa [#allocation6], 0
    %s14 = scalar_lea.sflag [#allocation6], 1
    %15 = vsyncpa %s14, 0
    %16 = vsyncpa [#allocation4], 0
    %s17 = scalar_lea.sflag [#allocation4], 1
    %18 = vsyncpa %s17, 0
    %19 = vsyncpa [#allocation10], 0
    %s20 = scalar_lea.sflag [#allocation10], 1
    %21 = vsyncpa %s20, 0
    loop: start=0, step=1, limit=4
    $region2: #{tpu_custom_call.1} parent=1 // loop_pre_header
      _
    $region3: #{tpu_custom_call.1} parent=1 // loop_header
      %s23 = sphi 0, %s27
      %p24 = scmp.ge.s32.totalorder %s23, 4
      %s33 = sphi 0, %s35
      %s36 = sphi 0, %s33
      %s37 = sphi 0, %s36
      %s53 = sphi 0, %s37
      %s59 = sphi 0, %s61
      %s62 = sphi 0, %s59
      %s63 = sphi 0, %s62
      %s79 = sphi 0, %s63
      %s85 = sphi 0, %s87
      %s88 = sphi 0, %s85
      %s89 = sphi 0, %s88
      %s105 = sphi 0, %s89
      %s111 = sphi 0, %s113
      %s114 = sphi 0, %s111
      %s115 = sphi 0, %s114
      %s131 = sphi 0, %s115
      %s137 = sphi 0, %s139
      %s140 = sphi 0, %s137
      %s141 = sphi 0, %s140
      %s157 = sphi 0, %s141
    $region4: #{tpu_custom_call.1} parent=1 // loop_header_branch
      %26 = sbr.rel (%p24) target = $region8
    $region5: #{tpu_custom_call.1} parent=1 // loop_body
      %s28 = ssub.s32 %s23, 1
      %s29 = ssub.s32 %s23, 2
      %s30 = sadd.s32 %s23, 1
      %s31 = ssub.s32 %s23, %s30
      %p32 = scmp.eq.s32.totalorder %s31, 0
      %s34 = sadd.s32 %s33, 1
      %s35 = scalar_select %p32, %s33, %s34
      %p38 = pneg %p32
      %p39 = scmp.eq.s32.totalorder %s23, 1
      %p40 = por %p38, %p39
      %p41 = scmp.ne.s32.totalorder %s33, %s36
      %p42 = scmp.eq.s32.totalorder %s23, 0
      %p43 = por %p41, %p42
      %p44 = scmp.ne.s32.totalorder %s33, %s36
      %p45 = scmp.eq.s32.totalorder %s28, 1
      %p46 = por %p44, %p45
      %p47 = scmp.ne.s32.totalorder %s36, %s37
      %p48 = scmp.eq.s32.totalorder %s28, 0
      %p49 = por %p47, %p48
      %p50 = scmp.ne.s32.totalorder %s36, %s37
      %p51 = scmp.eq.s32.totalorder %s29, 1
      %p52 = por %p50, %p51
      %p54 = scmp.ne.s32.totalorder %s37, %s53
      %p55 = scmp.eq.s32.totalorder %s29, 0
      %p56 = por %p54, %p55
      %s57 = ssub.s32 %s23, %s30
      %p58 = scmp.eq.s32.totalorder %s57, 0
      %s60 = sadd.s32 %s59, 1
      %s61 = scalar_select %p58, %s59, %s60
      %p64 = pneg %p58
      %p65 = scmp.eq.s32.totalorder %s23, 1
      %p66 = por %p64, %p65
      %p67 = scmp.ne.s32.totalorder %s59, %s62
      %p68 = scmp.eq.s32.totalorder %s23, 0
      %p69 = por %p67, %p68
      %p70 = scmp.ne.s32.totalorder %s59, %s62
      %p71 = scmp.eq.s32.totalorder %s28, 1
      %p72 = por %p70, %p71
      %p73 = scmp.ne.s32.totalorder %s62, %s63
      %p74 = scmp.eq.s32.totalorder %s28, 0
      %p75 = por %p73, %p74
      %p76 = scmp.ne.s32.totalorder %s62, %s63
      %p77 = scmp.eq.s32.totalorder %s29, 1
      %p78 = por %p76, %p77
      %p80 = scmp.ne.s32.totalorder %s63, %s79
      %p81 = scmp.eq.s32.totalorder %s29, 0
      %p82 = por %p80, %p81
      %s83 = ssub.s32 %s23, %s30
      %p84 = scmp.eq.s32.totalorder %s83, 0
      %s86 = sadd.s32 %s85, 1
      %s87 = scalar_select %p84, %s85, %s86
      %p90 = pneg %p84
      %p91 = scmp.eq.s32.totalorder %s23, 1
      %p92 = por %p90, %p91
      %p93 = scmp.ne.s32.totalorder %s85, %s88
      %p94 = scmp.eq.s32.totalorder %s23, 0
      %p95 = por %p93, %p94
      %p96 = scmp.ne.s32.totalorder %s85, %s88
      %p97 = scmp.eq.s32.totalorder %s28, 1
      %p98 = por %p96, %p97
      %p99 = scmp.ne.s32.totalorder %s88, %s89
      %p100 = scmp.eq.s32.totalorder %s28, 0
      %p101 = por %p99, %p100
      %p102 = scmp.ne.s32.totalorder %s88, %s89
      %p103 = scmp.eq.s32.totalorder %s29, 1
      %p104 = por %p102, %p103
      %p106 = scmp.ne.s32.totalorder %s89, %s105
      %p107 = scmp.eq.s32.totalorder %s29, 0
      %p108 = por %p106, %p107
      %s109 = ssub.s32 %s23, %s30
      %p110 = scmp.eq.s32.totalorder %s109, 0
      %s112 = sadd.s32 %s111, 1
      %s113 = scalar_select %p110, %s111, %s112
      %p116 = pneg %p110
      %p117 = scmp.eq.s32.totalorder %s23, 1
      %p118 = por %p116, %p117
      %p119 = scmp.ne.s32.totalorder %s111, %s114
      %p120 = scmp.eq.s32.totalorder %s23, 0
      %p121 = por %p119, %p120
      %p122 = scmp.ne.s32.totalorder %s111, %s114
      %p123 = scmp.eq.s32.totalorder %s28, 1
      %p124 = por %p122, %p123
      %p125 = scmp.ne.s32.totalorder %s114, %s115
      %p126 = scmp.eq.s32.totalorder %s28, 0
      %p127 = por %p125, %p126
      %p128 = scmp.ne.s32.totalorder %s114, %s115
      %p129 = scmp.eq.s32.totalorder %s29, 1
      %p130 = por %p128, %p129
      %p132 = scmp.ne.s32.totalorder %s115, %s131
      %p133 = scmp.eq.s32.totalorder %s29, 0
      %p134 = por %p132, %p133
      %s135 = ssub.s32 %s23, %s30
      %p136 = scmp.eq.s32.totalorder %s135, 0
      %s138 = sadd.s32 %s137, 1
      %s139 = scalar_select %p136, %s137, %s138
      %p142 = pneg %p136
      %p143 = scmp.eq.s32.totalorder %s23, 1
      %p144 = por %p142, %p143
      %p145 = scmp.ne.s32.totalorder %s137, %s140
      %p146 = scmp.eq.s32.totalorder %s23, 0
      %p147 = por %p145, %p146
      %p148 = scmp.ne.s32.totalorder %s137, %s140
      %p149 = scmp.eq.s32.totalorder %s28, 1
      %p150 = por %p148, %p149
      %p151 = scmp.ne.s32.totalorder %s140, %s141
      %p152 = scmp.eq.s32.totalorder %s28, 0
      %p153 = por %p151, %p152
      %p154 = scmp.ne.s32.totalorder %s140, %s141
      %p155 = scmp.eq.s32.totalorder %s29, 1
      %p156 = por %p154, %p155
      %p158 = scmp.ne.s32.totalorder %s141, %s157
      %p159 = scmp.eq.s32.totalorder %s29, 0
      %p160 = por %p158, %p159
      %p161 = scmp.le.s32.totalorder 1, %s23
      %p162 = scmp.lt.s32.totalorder %s23, 3
      %p163 = pnand %p161, %p162
      %p164 = pneg %p163
      // Predicated region
      $region9: #{tpu_custom_call.1} parent=5 // pred_check
        _
      $region10: #{tpu_custom_call.1} parent=5 // pred_check_branch
        %166 = sbr.rel (%p163) target = $region12
      $region11: #{tpu_custom_call.1} parent=5 // pred_region
        %s167 = ssub.s32 %s23, 1
      $region12: #{tpu_custom_call.1} parent=5 // pred_fallthru
        _
      %p168 = scmp.lt.s32.totalorder %s23, 2
      // Predicated region
      $region13: #{tpu_custom_call.1} parent=5 // pred_check
        %p169 = pneg %p168
      $region14: #{tpu_custom_call.1} parent=5 // pred_check_branch
        %171 = sbr.rel (%p169) target = $region16
      $region15: #{tpu_custom_call.1} parent=5 // pred_region
        // Predicated region
        $region17: #{tpu_custom_call.1} parent=15 // pred_check
          %p172 = pneg %p43
        $region18: #{tpu_custom_call.1} parent=15 // pred_check_branch
          %174 = sbr.rel (%p172) target = $region20
        $region19: #{tpu_custom_call.1} parent=15 // pred_region
          %s175 = sand.u32 %s33, 1
          %s176 = scalar_lea.sflag [#allocation3], %s175
          %s177 = sand.u32 %s33, 1
          %s178 = smul.addr %s177, 8
          %s179 = scalar_lea.vmem [#allocation2], %s178
          %s181 = ssub.s32 128, 128
          %182 = vsyncadd %s176, %s181
          %s183 = smul.addr %s23, 128
          %s184 = scalar_lea.hbm %s0, %s183
          %s186 = sshll.u32 %s179, 4
          %s187 = int_to_ptr.vmem [resolvable:$true] %s186
          %189 = dma.hbm_to_vmem [thread:$0]  %s184, 128, %s187, %s176
        $region20: #{tpu_custom_call.1} parent=15 // pred_fallthru
          _
        // Predicated region
        $region21: #{tpu_custom_call.1} parent=15 // pred_check
          %p190 = pneg %p69
        $region22: #{tpu_custom_call.1} parent=15 // pred_check_branch
          %192 = sbr.rel (%p190) target = $region24
        $region23: #{tpu_custom_call.1} parent=15 // pred_region
          %s193 = sand.u32 %s23, 1
          %s194 = scalar_lea.sflag [#allocation6], %s193
          %s195 = sand.u32 %s59, 1
          %s196 = smul.addr %s195, 8
          %s197 = scalar_lea.vmem [#allocation5], %s196
          %s199 = ssub.s32 128, 128
          %200 = vsyncadd %s194, %s199
          %s201 = smul.addr %s23, 128
          %s202 = scalar_lea.hbm %s1, %s201
          %s204 = sshll.u32 %s197, 4
          %s205 = int_to_ptr.vmem [resolvable:$true] %s204
          %207 = dma.hbm_to_vmem [thread:$0]  %s202, 128, %s205, %s194
        $region24: #{tpu_custom_call.1} parent=15 // pred_fallthru
          _
        // Predicated region
        $region25: #{tpu_custom_call.1} parent=15 // pred_check
          %p208 = pneg %p95
        $region26: #{tpu_custom_call.1} parent=15 // pred_check_branch
          %210 = sbr.rel (%p208) target = $region28
        $region27: #{tpu_custom_call.1} parent=15 // pred_region
          %s211 = sand.u32 %s23, 1
          %s212 = scalar_lea.sflag [#allocation6], %s211
          %s213 = sand.u32 %s85, 1
          %s214 = smul.addr %s213, 8
          %s215 = scalar_lea.vmem [#allocation7], %s214
          %s217 = ssub.s32 128, 128
          %218 = vsyncadd %s212, %s217
          %s219 = smul.addr %s23, 128
          %s220 = scalar_lea.hbm %s2, %s219
          %s222 = sshll.u32 %s215, 4
          %s223 = int_to_ptr.vmem [resolvable:$true] %s222
          %225 = dma.hbm_to_vmem [thread:$0]  %s220, 128, %s223, %s212
        $region28: #{tpu_custom_call.1} parent=15 // pred_fallthru
          _
      $region16: #{tpu_custom_call.1} parent=5 // pred_fallthru
        _
      %p226 = scmp.le.s32.totalorder 1, %s23
      %p227 = scmp.lt.s32.totalorder %s23, 3
      %p228 = pnand %p226, %p227
      %p229 = pneg %p228
      // Predicated region
      $region29: #{tpu_custom_call.1} parent=5 // pred_check
        _
      $region30: #{tpu_custom_call.1} parent=5 // pred_check_branch
        %231 = sbr.rel (%p228) target = $region32
      $region31: #{tpu_custom_call.1} parent=5 // pred_region
        %s232 = ssub.s32 %s23, 1
        %s233 = sand.u32 %s36, 1
        %s234 = scalar_lea.sflag [#allocation3], %s233
        %s235 = sand.u32 %s36, 1
        %s236 = smul.addr %s235, 8
        %s237 = scalar_lea.vmem [#allocation2], %s236
        // Predicated region
        $region33: #{tpu_custom_call.1} parent=31 // pred_check
          %p238 = pneg %p49
        $region34: #{tpu_custom_call.1} parent=31 // pred_check_branch
          %240 = sbr.rel (%p238) target = $region36
        $region35: #{tpu_custom_call.1} parent=31 // pred_region
          %241 = dma.done %s234, 128
        $region36: #{tpu_custom_call.1} parent=31 // pred_fallthru
          _
        %s242 = sand.u32 %s28, 1
        %s243 = scalar_lea.sflag [#allocation6], %s242
        %s244 = sand.u32 %s62, 1
        %s245 = smul.addr %s244, 8
        %s246 = scalar_lea.vmem [#allocation5], %s245
        // Predicated region
        $region37: #{tpu_custom_call.1} parent=31 // pred_check
          %p247 = pneg %p75
        $region38: #{tpu_custom_call.1} parent=31 // pred_check_branch
          %249 = sbr.rel (%p247) target = $region40
        $region39: #{tpu_custom_call.1} parent=31 // pred_region
          %250 = dma.done %s243, 128
        $region40: #{tpu_custom_call.1} parent=31 // pred_fallthru
          _
        %s251 = sand.u32 %s28, 1
        %s252 = scalar_lea.sflag [#allocation6], %s251
        %s253 = sand.u32 %s88, 1
        %s254 = smul.addr %s253, 8
        %s255 = scalar_lea.vmem [#allocation7], %s254
        // Predicated region
        $region41: #{tpu_custom_call.1} parent=31 // pred_check
          %p256 = pneg %p101
        $region42: #{tpu_custom_call.1} parent=31 // pred_check_branch
          %258 = sbr.rel (%p256) target = $region44
        $region43: #{tpu_custom_call.1} parent=31 // pred_region
          %259 = dma.done %s252, 128
        $region44: #{tpu_custom_call.1} parent=31 // pred_fallthru
          _
        %s260 = sand.u32 %s36, 1
        %s261 = scalar_lea.sflag [#allocation3], %s260
        %s262 = sand.u32 %s36, 1
        %s263 = smul.addr %s262, 8
        %s264 = scalar_lea.vmem [#allocation2], %s263
        %p265 = pneg %p49
        %p266 = pneg %p46
        %s267 = sand.u32 %s28, 1
        %s268 = scalar_lea.sflag [#allocation6], %s267
        %s269 = sand.u32 %s62, 1
        %s270 = smul.addr %s269, 8
        %s271 = scalar_lea.vmem [#allocation5], %s270
        %p272 = pneg %p75
        %p273 = pneg %p72
        %s274 = sand.u32 %s28, 1
        %s275 = scalar_lea.sflag [#allocation6], %s274
        %s276 = sand.u32 %s88, 1
        %s277 = smul.addr %s276, 8
        %s278 = scalar_lea.vmem [#allocation7], %s277
        %p279 = pneg %p101
        %p280 = pneg %p98
        %p281 = pneg %p127
        %p282 = pneg %p124
        %s283 = sand.u32 %s114, 1
        %s284 = scalar_lea.sflag [#allocation4], %s283
        %s285 = sand.u32 %s114, 1
        %s286 = smul.addr %s285, 8
        %s287 = scalar_lea.vmem [#allocation8], %s286
        %p288 = pneg %p153
        %p289 = pneg %p150
        %s290 = sand.u32 %s140, 1
        %s291 = scalar_lea.sflag [#allocation10], %s290
        %s292 = sand.u32 %s140, 1
        %s293 = smul.addr %s292, 8
        %s294 = scalar_lea.vmem [#allocation9], %s293
        %v295 = vld [vmem:[%s246] sm:$0xff]
        %v296 = vld [vmem:[%s237] sm:$0xff]
        %v297 = vsub.f32 %v295, %v296
        %v298 = vld [vmem:[%s255] sm:$0xff]
        %v299 = vadd.f32 %v297, %v298
        %v300 = vsub.f32 %v297, %v298
        %v301 = vmul.f32 %v299, 0.1
        %v302 = vmul.f32 %v299, -0.9
        %v303 = vmax.f32 %v301, %v302
        %304 = vst [vmem:[%s287] sm:$0xff] %v303
        %v305 = vmul.f32 %v300, 0.9
        %v306 = vmul.f32 %v300, -0.1
        %v307 = vmax.f32 %v305, %v306
        %308 = vst [vmem:[%s294] sm:$0xff] %v307
        %s309 = sand.u32 %s114, 1
        %s310 = scalar_lea.sflag [#allocation4], %s309
        %s311 = sand.u32 %s114, 1
        %s312 = smul.addr %s311, 8
        %s313 = scalar_lea.vmem [#allocation8], %s312
        %s314 = sand.u32 %s140, 1
        %s315 = scalar_lea.sflag [#allocation10], %s314
        %s316 = sand.u32 %s140, 1
        %s317 = smul.addr %s316, 8
        %s318 = scalar_lea.vmem [#allocation9], %s317
        // Predicated region
        $region45: #{tpu_custom_call.1} parent=31 // pred_check
          %p319 = pneg %p124
        $region46: #{tpu_custom_call.1} parent=31 // pred_check_branch
          %321 = sbr.rel (%p319) target = $region48
        $region47: #{tpu_custom_call.1} parent=31 // pred_region
          %s323 = ssub.s32 128, 128
          %324 = vsyncadd %s310, %s323
          %s325 = smul.addr %s28, 128
          %s326 = scalar_lea.hbm %s3, %s325
          %s328 = sshll.u32 %s313, 4
          %s329 = int_to_ptr.vmem [resolvable:$true] %s328
          %331 = dma.vmem_to_hbm [thread:$0]  %s329, 128, %s326, %s310
        $region48: #{tpu_custom_call.1} parent=31 // pred_fallthru
          _
        // Predicated region
        $region49: #{tpu_custom_call.1} parent=31 // pred_check
          %p332 = pneg %p150
        $region50: #{tpu_custom_call.1} parent=31 // pred_check_branch
          %334 = sbr.rel (%p332) target = $region52
        $region51: #{tpu_custom_call.1} parent=31 // pred_region
          %s336 = ssub.s32 128, 128
          %337 = vsyncadd %s315, %s336
          %s338 = smul.addr %s28, 128
          %s339 = scalar_lea.hbm %s4, %s338
          %s341 = sshll.u32 %s318, 4
          %s342 = int_to_ptr.vmem [resolvable:$true] %s341
          %344 = dma.vmem_to_hbm [thread:$0]  %s342, 128, %s339, %s315
        $region52: #{tpu_custom_call.1} parent=31 // pred_fallthru
          _
      $region32: #{tpu_custom_call.1} parent=5 // pred_fallthru
        _
      %p345 = scmp.le.s32.totalorder 2, %s23
      // Predicated region
      $region53: #{tpu_custom_call.1} parent=5 // pred_check
        %p346 = pneg %p345
      $region54: #{tpu_custom_call.1} parent=5 // pred_check_branch
        %348 = sbr.rel (%p346) target = $region56
      $region55: #{tpu_custom_call.1} parent=5 // pred_region
        %s349 = ssub.s32 %s23, 2
        // Predicated region
        $region57: #{tpu_custom_call.1} parent=55 // pred_check
          %p350 = pneg %p130
        $region58: #{tpu_custom_call.1} parent=55 // pred_check_branch
          %352 = sbr.rel (%p350) target = $region60
        $region59: #{tpu_custom_call.1} parent=55 // pred_region
          %s353 = sand.u32 %s115, 1
          %s354 = scalar_lea.sflag [#allocation4], %s353
          %s355 = sand.u32 %s115, 1
          %s356 = smul.addr %s355, 8
          %s357 = scalar_lea.vmem [#allocation8], %s356
          %358 = dma.done %s354, 128
        $region60: #{tpu_custom_call.1} parent=55 // pred_fallthru
          _
        // Predicated region
        $region61: #{tpu_custom_call.1} parent=55 // pred_check
          %p359 = pneg %p156
        $region62: #{tpu_custom_call.1} parent=55 // pred_check_branch
          %361 = sbr.rel (%p359) target = $region64
        $region63: #{tpu_custom_call.1} parent=55 // pred_region
          %s362 = sand.u32 %s141, 1
          %s363 = scalar_lea.sflag [#allocation10], %s362
          %s364 = sand.u32 %s141, 1
          %s365 = smul.addr %s364, 8
          %s366 = scalar_lea.vmem [#allocation9], %s365
          %367 = dma.done %s363, 128
        $region64: #{tpu_custom_call.1} parent=55 // pred_fallthru
          _
      $region56: #{tpu_custom_call.1} parent=5 // pred_fallthru
        _
    $region6: #{tpu_custom_call.1} parent=1 // loop_footer
      %s27 = sadd.s32 1, %s23
    $region7: #{tpu_custom_call.1} parent=1 // loop_footer_branch
      %22 = sbr.rel target = $region3
    $region8: #{tpu_custom_call.1} parent=1 // loop_exit
      _
    %368 = vsyncpa [#allocation3], 1
    %s369 = scalar_lea.sflag [#allocation3], 1
    %370 = vsyncpa %s369, 1
    %371 = vsyncpa [#allocation6], 1
    %s372 = scalar_lea.sflag [#allocation6], 1
    %373 = vsyncpa %s372, 1
    %374 = vsyncpa [#allocation4], 1
    %s375 = scalar_lea.sflag [#allocation4], 1
    %376 = vsyncpa %s375, 1
    %377 = vsyncpa [#allocation10], 1
    %s378 = scalar_lea.sflag [#allocation10], 1
    %379 = vsyncpa %s378, 1

</llo_original>
